<compile_context>
chip_gen: v7x
topology: tpu7x:2x2x1
jax: 0.10.0
libtpu: 0.0.40
codegen_flags: <defaults>
</compile_context>

<pallas_src>
import math
import functools

import jax
import jax.numpy as jnp
from jax.experimental import pallas as pl
from jax.experimental.pallas import tpu as pltpu


# ----------------------------- kernels ---------------------------------------

def _qkv_proj_kernel(xq_ref, xk_ref, xv_ref,
                     wq_ref, bq_ref, wk_ref, bk_ref, wv_ref, bv_ref,
                     q_ref, k_ref, v_ref):
    """One row tile of the three input projections.  Weights are (in, out)."""
    def proj(x_ref, w_ref, b_ref, o_ref):
        acc = jnp.dot(x_ref[...], w_ref[...], preferred_element_type=jnp.float32)
        o_ref[...] = (acc + b_ref[...]).astype(o_ref.dtype)
    proj(xq_ref, wq_ref, bq_ref, q_ref)
    proj(xk_ref, wk_ref, bk_ref, k_ref)
    proj(xv_ref, wv_ref, bv_ref, v_ref)


def _linear_kernel(x_ref, w_ref, b_ref, o_ref):
    """One row tile of x @ W + b with W stored as (in, out)."""
    acc = jnp.dot(x_ref[...], w_ref[...], preferred_element_type=jnp.float32)
    o_ref[...] = (acc + b_ref[...]).astype(o_ref.dtype)


def _flash_attn_kernel(q_ref, k_ref, v_ref, o_ref, m_sc, l_sc, acc_sc, *,
                       scale, n_head, d_head, kv_tile, kv_len, exact_softmax):
    """Online-softmax attention over one (batch, q_tile) block; kv is grid axis 2.

    q/k/v blocks arrive in lane-dense (1, tile, d_model) layout; the head split
    is an in-VMEM reshape+transpose (XLU relayout), replacing the HBM transpose
    passes the old split_heads()/concat() path paid for.
    """
    ki = pl.program_id(2)

    @pl.when(ki == 0)
    def _init():
        m_sc[...] = jnp.full_like(m_sc, -jnp.inf)
        l_sc[...] = jnp.zeros_like(l_sc)
        acc_sc[...] = jnp.zeros_like(acc_sc)

    tq = q_ref.shape[1]
    tk = k_ref.shape[1]

    # (tile, d_model) -> (n_head, tile, d_head): VMEM-resident relayout only.
    q = jnp.transpose(q_ref[0].reshape(tq, n_head, d_head), (1, 0, 2))
    k = jnp.transpose(k_ref[0].reshape(tk, n_head, d_head), (1, 0, 2))
    v = jnp.transpose(v_ref[0].reshape(tk, n_head, d_head), (1, 0, 2))

    s = jnp.einsum("hqd,hkd->hqk", q, k,
                   preferred_element_type=jnp.float32) * scale

    if kv_len % kv_tile:  # static: mask zero-padded kv positions of the tail tile
        kv_pos = ki * kv_tile + jax.lax.broadcasted_iota(jnp.int32, (1, 1, tk), 2)
        s = jnp.where(kv_pos < kv_len, s, -1e30)

    m_prev = m_sc[...]
    m_new = jnp.maximum(m_prev, jnp.max(s, axis=-1, keepdims=True))
    alpha = jnp.exp(m_prev - m_new)
    # TODO(synk): in the bf16 throughput mode on v6e/v7x, evaluate exp in bf16 to
    # halve EUP pressure once a bundle dump confirms EUP is the saturated slot.
    p = jnp.exp(s - m_new)
    l_sc[...] = alpha * l_sc[...] + jnp.sum(p, axis=-1, keepdims=True)
    acc_sc[...] = alpha * acc_sc[...] + jnp.einsum(
        "hqk,hkd->hqd", p.astype(v.dtype), v, preferred_element_type=jnp.float32)
    m_sc[...] = m_new

    @pl.when(ki == pl.num_programs(2) - 1)
    def _finalize():
        if exact_softmax:
            ctx = acc_sc[...] / l_sc[...]                          # f32 path: exact
        else:
            ctx = acc_sc[...] * pl.reciprocal(l_sc[...], approx=True)  # EUP slot
        # Head merge back to the lane-dense (tq, d_model) layout before the store.
        ctx = jnp.transpose(ctx, (1, 0, 2)).reshape(tq, n_head * d_head)
        o_ref[0] = ctx.astype(o_ref.dtype)


# ----------------------------- tiling helpers ---------------------------------

def _round_up(x, m):
    return ((x + m - 1) // m) * m


def _vmem_budgets():
    """Generation-aware VMEM limit and per-grid-step working-set budget."""
    cap = 128 * 1024 * 1024
    try:
        info = pltpu.get_tpu_info()
        cap = int(getattr(info, "vmem_capacity_bytes", cap)) or cap
    except Exception:
        pass
    vmem_limit = (3 * cap) // 4   # ~48 MiB on v7x (64 MiB VMEM), ~96 MiB on v5e/v6e
    step_budget = cap // 5        # ~12.8 MiB on v7x, ~25.6 MiB on v5e/v6e
    return vmem_limit, step_budget


def _pick_seq_tile(batch, seq, n_head, d_model, itemsize, step_budget):
    """q/kv tile for the flash core: largest tile fitting the per-step budget."""
    d_head = d_model // n_head
    seq8 = max(8, _round_up(seq, 8))
    # Prefer >=2 parallel grid steps so both v7x TensorCores get work.
    limit = seq8 if batch > 1 else max(8, (seq8 // 2) // 8 * 8)
    best = 8
    for cand in (8, 16, 32, 64, 128, 256, 512):
        if cand > limit:
            break
        cost = (6 * cand * d_model * itemsize        # q,k,v tiles (double-buffered)
                + 2 * cand * d_model * itemsize      # ctx out tile (double-buffered)
                + n_head * cand * (d_head + 2) * 4   # online-softmax scratch
                + 3 * n_head * cand * cand * 4)      # s / p f32 intermediates + slack
        if cost <= step_budget:
            best = cand
    return best


def _pick_row_tile(m, d_model, itemsize, step_budget, vmem_limit, n_proj):
    """Row tile for the projection kernels (m is already a multiple of 8)."""
    weight_bytes = n_proj * (d_model * d_model * itemsize + d_model * 4)
    # TODO(synk): for d_model >~ 2k f32 on v7x, column-tile the weights instead of
    # holding full (d_model, d_model) blocks resident in VMEM.
    rows_budget = min(step_budget, max(vmem_limit - weight_bytes - (4 << 20), 1 << 20))
    best = 8
    for cand in (8, 16, 32, 64, 128, 256, 512, 1024):
        if cand > m or (m >= 16 and cand > m // 2):   # keep >=2 grid steps
            break
        if m % cand:
            continue
        cost = n_proj * cand * d_model * (4 * itemsize + 4)  # in+out dbl-buf + f32 acc
        if cost <= rows_budget:
            best = cand
    return best


def _const_spec(shape, index_map):
    """Grid-invariant block (constant index_map): single-buffer it — double
    buffering a constant is pure VMEM waste."""
    try:
        return pl.BlockSpec(shape, index_map, pipeline_mode=pl.Buffered(1))
    except Exception:  # older JAX without pipeline_mode / Buffered
        return pl.BlockSpec(shape, index_map)


# ----------------------------- wrapper ----------------------------------------

def multi_head_attention(Q, K, V, params, n_head, *, compute_dtype=jnp.float32):
    """Q, K, V: [batch, seq, d_model].  params: PyTorch-style (out, in) weights + biases."""
    assert Q.ndim == K.ndim == V.ndim == 3
    batch, seq, d_model = Q.shape
    assert d_model % n_head == 0
    assert K.shape == V.shape and K.shape[0] == batch and K.shape[2] == d_model
    # TODO(synk): cross-attention with seq_kv != seq_q needs a separate row grid
    # for the K/V projection; the rawformer classifier uses self-attention.
    assert K.shape[1] == seq, "kernel currently assumes seq_kv == seq_q"

    d_head = d_model // n_head
    scale = 1.0 / math.sqrt(d_head)
    out_dtype = Q.dtype
    cdt = jnp.dtype(compute_dtype)
    isz = cdt.itemsize
    exact_softmax = (cdt == jnp.float32)

    vmem_limit, step_budget = _vmem_budgets()
    t_seq = _pick_seq_tile(batch, seq, n_head, d_model, isz, step_budget)
    seq_pad = _round_up(seq, t_seq)
    m = batch * seq_pad
    tm = _pick_row_tile(m, d_model, isz, step_budget, vmem_limit, n_proj=3)
    tmo = _pick_row_tile(m, d_model, isz, step_budget, vmem_limit, n_proj=1)

    wq, bq, wk, bk, wv, bv, wo, bo = params
    # Pre-transpose weights once in the wrapper: stored (in, out), so the kernels
    # contract directly with no in-kernel XLU transpose.
    wq_t, wk_t, wv_t, wo_t = (w.T.astype(cdt) for w in (wq, wk, wv, wo))
    bq2, bk2, bv2, bo2 = (b.reshape(1, d_model).astype(jnp.float32)
                          for b in (bq, bk, bv, bo))

    def prep(x):
        if seq_pad != seq:
            x = jnp.pad(x, ((0, 0), (0, seq_pad - seq), (0, 0)))
        return x.astype(cdt)

    xq, xk, xv = prep(Q), prep(K), prep(V)

    def mosaic(sem):
        return pltpu.CompilerParams(dimension_semantics=sem,
                                    vmem_limit_bytes=vmem_limit)

    # ---- 1) fused Q/K/V projections over all batch*seq_pad rows --------------
    row_spec = pl.BlockSpec((tm, d_model), lambda i: (i, 0))
    w_spec = _const_spec((d_model, d_model), lambda i: (0, 0))
    b_spec = _const_spec((1, d_model), lambda i: (0, 0))

    q_p, k_p, v_p = pl.pallas_call(
        _qkv_proj_kernel,
        out_shape=tuple(jax.ShapeDtypeStruct((m, d_model), cdt) for _ in range(3)),
        grid_spec=pltpu.PrefetchScalarGridSpec(
            num_scalar_prefetch=0,
            grid=(m // tm,),
            in_specs=[row_spec, row_spec, row_spec,
                      w_spec, b_spec, w_spec, b_spec, w_spec, b_spec],
            out_specs=(row_spec, row_spec, row_spec),
        ),
        compiler_params=mosaic(("parallel",)),
    )(xq.reshape(m, d_model), xk.reshape(m, d_model), xv.reshape(m, d_model),
      wq_t, bq2, wk_t, bk2, wv_t, bv2)

    # ---- 2) flash attention core (heads split/merged in-kernel) --------------
    q3 = q_p.reshape(batch, seq_pad, d_model)   # free reshapes, no transposes
    k3 = k_p.reshape(batch, seq_pad, d_model)
    v3 = v_p.reshape(batch, seq_pad, d_model)
    n_t = seq_pad // t_seq

    q_spec = pl.BlockSpec((1, t_seq, d_model), lambda b, qi, ki: (b, qi, 0))
    kv_spec = pl.BlockSpec((1, t_seq, d_model), lambda b, qi, ki: (b, ki, 0))
    o_spec = pl.BlockSpec((1, t_seq, d_model), lambda b, qi, ki: (b, qi, 0))

    ctx = pl.pallas_call(
        functools.partial(_flash_attn_kernel, scale=scale, n_head=n_head,
                          d_head=d_head, kv_tile=t_seq, kv_len=seq,
                          exact_softmax=exact_softmax),
        out_shape=jax.ShapeDtypeStruct((batch, seq_pad, d_model), cdt),
        grid_spec=pltpu.PrefetchScalarGridSpec(
            num_scalar_prefetch=0,
            grid=(batch, n_t, n_t),
            in_specs=[q_spec, kv_spec, kv_spec],
            out_specs=o_spec,
            scratch_shapes=[pltpu.VMEM((n_head, t_seq, 1), jnp.float32),
                            pltpu.VMEM((n_head, t_seq, 1), jnp.float32),
                            pltpu.VMEM((n_head, t_seq, d_head), jnp.float32)],
        ),
        compiler_params=mosaic(("parallel", "parallel", "arbitrary")),
    )(q3, k3, v3)

    # ---- 3) output projection (ctx already merged & lane-dense) --------------
    out = pl.pallas_call(
        _linear_kernel,
        out_shape=jax.ShapeDtypeStruct((m, d_model), out_dtype),
        grid_spec=pltpu.PrefetchScalarGridSpec(
            num_scalar_prefetch=0,
            grid=(m // tmo,),
            in_specs=[pl.BlockSpec((tmo, d_model), lambda i: (i, 0)),
                      _const_spec((d_model, d_model), lambda i: (0, 0)),
                      _const_spec((1, d_model), lambda i: (0, 0))],
            out_specs=pl.BlockSpec((tmo, d_model), lambda i: (i, 0)),
        ),
        compiler_params=mosaic(("parallel",)),
    )(ctx.reshape(m, d_model), wo_t, bo2)

    out = out.reshape(batch, seq_pad, d_model)
    if seq_pad != seq:
        out = out[:, :seq, :]
    return out


# ----------------------------- reference & test --------------------------------

def _reference(Q, K, V, params, n_head):
    """Pure-JAX f32 reference mirroring the PyTorch forward."""
    wq, bq, wk, bk, wv, bv, wo, bo = params
    batch, seq, d_model = Q.shape
    d_head = d_model // n_head

    def split(t):
        return t.reshape(batch, seq, n_head, d_head).transpose(0, 2, 1, 3)

    q = split(Q @ wq.T + bq)
    k = split(K @ wk.T + bk)
    v = split(V @ wv.T + bv)
    score = jnp.einsum("bhqd,bhkd->bhqk", q, k) / math.sqrt(d_head)
    p = jax.nn.softmax(score, axis=-1)
    out = jnp.einsum("bhqk,bhkd->bhqd", p, v)
    out = out.transpose(0, 2, 1, 3).reshape(batch, seq, d_model)
    return out @ wo.T + bo


def _make_case(key, batch, seq_len, d_model):
    keys = jax.random.split(key, 11)
    bound = 1.0 / math.sqrt(d_model)

    def u(k, shape):
        return jax.random.uniform(k, shape, jnp.float32, -bound, bound)

    params = (u(keys[0], (d_model, d_model)), u(keys[1], (d_model,)),
              u(keys[2], (d_model, d_model)), u(keys[3], (d_model,)),
              u(keys[4], (d_model, d_model)), u(keys[5], (d_model,)),
              u(keys[6], (d_model, d_model)), u(keys[7], (d_model,)))
    Q = jax.random.normal(keys[8], (batch, seq_len, d_model), jnp.float32)
    K = jax.random.normal(keys[9], (batch, seq_len, d_model), jnp.float32)
    V = jax.random.normal(keys[10], (batch, seq_len, d_model), jnp.float32)
    return Q, K, V, params


if __name__ == "__main__":
    root = jax.random.PRNGKey(0)
    k1, k2 = jax.random.split(root)
    n_head = 4

    # Case 1: canonical tiny shape (batch=2, seq=8, d_model=32).
    Q, K, V, params = _make_case(k1, batch=2, seq_len=8, d_model=32)
    ref = _reference(Q, K, V, params, n_head)

    out_f32 = jax.block_until_ready(
        multi_head_attention(Q, K, V, params, n_head, compute_dtype=jnp.float32))
    assert out_f32.shape == Q.shape
    assert jnp.allclose(out_f32, ref, atol=2e-3, rtol=2e-3), "f32 mismatch vs reference"

    out_bf16 = jax.block_until_ready(
        multi_head_attention(Q, K, V, params, n_head, compute_dtype=jnp.bfloat16))
    assert out_bf16.shape == Q.shape
    assert jnp.allclose(out_bf16, ref, atol=3e-2, rtol=3e-2), "bf16 mismatch vs reference"

    # Case 2: non-tile-aligned seq (exercises padding, in-kernel kv masking,
    # multi-q/kv-tile online softmax, and multi-step row grids).
    Q2, K2, V2, params2 = _make_case(k2, batch=1, seq_len=20, d_model=32)
    ref2 = _reference(Q2, K2, V2, params2, n_head)
    out2 = jax.block_until_ready(
        multi_head_attention(Q2, K2, V2, params2, n_head, compute_dtype=jnp.float32))
    assert out2.shape == Q2.shape
    assert jnp.allclose(out2, ref2, atol=2e-3, rtol=2e-3), "padded-case mismatch vs reference"

    print("KERNEL_OK")
</pallas_src>

<mosaic_0001>
module attributes {stable_mosaic.version = 11 : i64} {
  func.func @_qkv_proj_kernel(%arg0: i32, %arg1: memref<8x32xf32, #tpu.memory_space<vmem>>, %arg2: memref<8x32xf32, #tpu.memory_space<vmem>>, %arg3: memref<8x32xf32, #tpu.memory_space<vmem>>, %arg4: memref<32x32xf32, #tpu.memory_space<vmem>>, %arg5: memref<1x32xf32, #tpu.memory_space<vmem>>, %arg6: memref<32x32xf32, #tpu.memory_space<vmem>>, %arg7: memref<1x32xf32, #tpu.memory_space<vmem>>, %arg8: memref<32x32xf32, #tpu.memory_space<vmem>>, %arg9: memref<1x32xf32, #tpu.memory_space<vmem>>, %arg10: memref<8x32xf32, #tpu.memory_space<vmem>>, %arg11: memref<8x32xf32, #tpu.memory_space<vmem>>, %arg12: memref<8x32xf32, #tpu.memory_space<vmem>>) attributes {dimension_semantics = [#tpu.dimension_semantics<parallel>], iteration_bounds = array<i64: 2>, scalar_prefetch = 0 : i64, scratch_operands = 0 : i64, tpu.core_type = #tpu.core_type<tc>, window_params = [{transform_indices = @transform_0, window_bounds = array<i64: 8, 32>}, {transform_indices = @transform_1, window_bounds = array<i64: 8, 32>}, {transform_indices = @transform_2, window_bounds = array<i64: 8, 32>}, {pipeline_mode = #tpu.pipeline_mode<synchronous>, transform_indices = @transform_3, window_bounds = array<i64: 32, 32>}, {pipeline_mode = #tpu.pipeline_mode<synchronous>, transform_indices = @transform_4, window_bounds = array<i64: 1, 32>}, {pipeline_mode = #tpu.pipeline_mode<synchronous>, transform_indices = @transform_5, window_bounds = array<i64: 32, 32>}, {pipeline_mode = #tpu.pipeline_mode<synchronous>, transform_indices = @transform_6, window_bounds = array<i64: 1, 32>}, {pipeline_mode = #tpu.pipeline_mode<synchronous>, transform_indices = @transform_7, window_bounds = array<i64: 32, 32>}, {pipeline_mode = #tpu.pipeline_mode<synchronous>, transform_indices = @transform_8, window_bounds = array<i64: 1, 32>}, {transform_indices = @transform_9, window_bounds = array<i64: 8, 32>}, {transform_indices = @transform_10, window_bounds = array<i64: 8, 32>}, {transform_indices = @transform_11, window_bounds = array<i64: 8, 32>}]} {
    %c0 = arith.constant 0 : index
    %c0_0 = arith.constant 0 : index
    %0 = vector.load %arg1[%c0, %c0_0] : memref<8x32xf32, #tpu.memory_space<vmem>>, vector<8x32xf32>
    %c0_1 = arith.constant 0 : index
    %c0_2 = arith.constant 0 : index
    %1 = vector.load %arg4[%c0_1, %c0_2] : memref<32x32xf32, #tpu.memory_space<vmem>>, vector<32x32xf32>
    %cst = arith.constant dense<0.000000e+00> : vector<8x32xf32>
    %2 = tpu.matmul %0, %1, %cst {dimension_numbers = #tpu.dot_dimension_numbers<[1], [0], [0], [1], [0, 0, 1, 1], [], []>} : vector<8x32xf32>, vector<32x32xf32>, vector<8x32xf32> -> vector<8x32xf32>
    %c0_3 = arith.constant 0 : index
    %c0_4 = arith.constant 0 : index
    %3 = vector.load %arg5[%c0_3, %c0_4] : memref<1x32xf32, #tpu.memory_space<vmem>>, vector<1x32xf32>
    %4 = vector.broadcast %3 : vector<1x32xf32> to vector<8x32xf32>
    %5 = arith.addf %2, %4 : vector<8x32xf32>
    %c0_5 = arith.constant 0 : index
    %c0_6 = arith.constant 0 : index
    %6 = vector.load %arg10[%c0_5, %c0_6] : memref<8x32xf32, #tpu.memory_space<vmem>>, vector<8x32xf32>
    tpu.vector_store %arg10[%c0_5, %c0_6], %5 {strides = array<i32>} : memref<8x32xf32, #tpu.memory_space<vmem>>, vector<8x32xf32>,
    %c0_7 = arith.constant 0 : index
    %c0_8 = arith.constant 0 : index
    %7 = vector.load %arg2[%c0_7, %c0_8] : memref<8x32xf32, #tpu.memory_space<vmem>>, vector<8x32xf32>
    %c0_9 = arith.constant 0 : index
    %c0_10 = arith.constant 0 : index
    %8 = vector.load %arg6[%c0_9, %c0_10] : memref<32x32xf32, #tpu.memory_space<vmem>>, vector<32x32xf32>
    %cst_11 = arith.constant dense<0.000000e+00> : vector<8x32xf32>
    %9 = tpu.matmul %7, %8, %cst_11 {dimension_numbers = #tpu.dot_dimension_numbers<[1], [0], [0], [1], [0, 0, 1, 1], [], []>} : vector<8x32xf32>, vector<32x32xf32>, vector<8x32xf32> -> vector<8x32xf32>
    %c0_12 = arith.constant 0 : index
    %c0_13 = arith.constant 0 : index
    %10 = vector.load %arg7[%c0_12, %c0_13] : memref<1x32xf32, #tpu.memory_space<vmem>>, vector<1x32xf32>
    %11 = vector.broadcast %10 : vector<1x32xf32> to vector<8x32xf32>
    %12 = arith.addf %9, %11 : vector<8x32xf32>
    %c0_14 = arith.constant 0 : index
    %c0_15 = arith.constant 0 : index
    %13 = vector.load %arg11[%c0_14, %c0_15] : memref<8x32xf32, #tpu.memory_space<vmem>>, vector<8x32xf32>
    tpu.vector_store %arg11[%c0_14, %c0_15], %12 {strides = array<i32>} : memref<8x32xf32, #tpu.memory_space<vmem>>, vector<8x32xf32>,
    %c0_16 = arith.constant 0 : index
    %c0_17 = arith.constant 0 : index
    %14 = vector.load %arg3[%c0_16, %c0_17] : memref<8x32xf32, #tpu.memory_space<vmem>>, vector<8x32xf32>
    %c0_18 = arith.constant 0 : index
    %c0_19 = arith.constant 0 : index
    %15 = vector.load %arg8[%c0_18, %c0_19] : memref<32x32xf32, #tpu.memory_space<vmem>>, vector<32x32xf32>
    %cst_20 = arith.constant dense<0.000000e+00> : vector<8x32xf32>
    %16 = tpu.matmul %14, %15, %cst_20 {dimension_numbers = #tpu.dot_dimension_numbers<[1], [0], [0], [1], [0, 0, 1, 1], [], []>} : vector<8x32xf32>, vector<32x32xf32>, vector<8x32xf32> -> vector<8x32xf32>
    %c0_21 = arith.constant 0 : index
    %c0_22 = arith.constant 0 : index
    %17 = vector.load %arg9[%c0_21, %c0_22] : memref<1x32xf32, #tpu.memory_space<vmem>>, vector<1x32xf32>
    %18 = vector.broadcast %17 : vector<1x32xf32> to vector<8x32xf32>
    %19 = arith.addf %16, %18 : vector<8x32xf32>
    %c0_23 = arith.constant 0 : index
    %c0_24 = arith.constant 0 : index
    %20 = vector.load %arg12[%c0_23, %c0_24] : memref<8x32xf32, #tpu.memory_space<vmem>>, vector<8x32xf32>
    tpu.vector_store %arg12[%c0_23, %c0_24], %19 {strides = array<i32>} : memref<8x32xf32, #tpu.memory_space<vmem>>, vector<8x32xf32>,
    return
  }
  func.func @transform_0(%arg0: i32) -> (i32, i32) {
    %c0_i32 = arith.constant 0 : i32
    %c0_i32_0 = arith.constant 0 : i32
    return %arg0, %c0_i32 : i32, i32
  }
  func.func @transform_1(%arg0: i32) -> (i32, i32) {
    %c0_i32 = arith.constant 0 : i32
    %c0_i32_0 = arith.constant 0 : i32
    return %arg0, %c0_i32 : i32, i32
  }
  func.func @transform_2(%arg0: i32) -> (i32, i32) {
    %c0_i32 = arith.constant 0 : i32
    %c0_i32_0 = arith.constant 0 : i32
    return %arg0, %c0_i32 : i32, i32
  }
  func.func @transform_3(%arg0: i32) -> (i32, i32) {
    %c0_i32 = arith.constant 0 : i32
    %c0_i32_0 = arith.constant 0 : i32
    %c0_i32_1 = arith.constant 0 : i32
    return %c0_i32, %c0_i32_0 : i32, i32
  }
  func.func @transform_4(%arg0: i32) -> (i32, i32) {
    %c0_i32 = arith.constant 0 : i32
    %c0_i32_0 = arith.constant 0 : i32
    %c0_i32_1 = arith.constant 0 : i32
    return %c0_i32, %c0_i32_0 : i32, i32
  }
  func.func @transform_5(%arg0: i32) -> (i32, i32) {
    %c0_i32 = arith.constant 0 : i32
    %c0_i32_0 = arith.constant 0 : i32
    %c0_i32_1 = arith.constant 0 : i32
    return %c0_i32, %c0_i32_0 : i32, i32
  }
  func.func @transform_6(%arg0: i32) -> (i32, i32) {
    %c0_i32 = arith.constant 0 : i32
    %c0_i32_0 = arith.constant 0 : i32
    %c0_i32_1 = arith.constant 0 : i32
    return %c0_i32, %c0_i32_0 : i32, i32
  }
  func.func @transform_7(%arg0: i32) -> (i32, i32) {
    %c0_i32 = arith.constant 0 : i32
    %c0_i32_0 = arith.constant 0 : i32
    %c0_i32_1 = arith.constant 0 : i32
    return %c0_i32, %c0_i32_0 : i32, i32
  }
  func.func @transform_8(%arg0: i32) -> (i32, i32) {
    %c0_i32 = arith.constant 0 : i32
    %c0_i32_0 = arith.constant 0 : i32
    %c0_i32_1 = arith.constant 0 : i32
    return %c0_i32, %c0_i32_0 : i32, i32
  }
  func.func @transform_9(%arg0: i32) -> (i32, i32) {
    %c0_i32 = arith.constant 0 : i32
    %c0_i32_0 = arith.constant 0 : i32
    return %arg0, %c0_i32 : i32, i32
  }
  func.func @transform_10(%arg0: i32) -> (i32, i32) {
    %c0_i32 = arith.constant 0 : i32
    %c0_i32_0 = arith.constant 0 : i32
    return %arg0, %c0_i32 : i32, i32
  }
  func.func @transform_11(%arg0: i32) -> (i32, i32) {
    %c0_i32 = arith.constant 0 : i32
    %c0_i32_0 = arith.constant 0 : i32
    return %arg0, %c0_i32 : i32, i32
  }
}

</mosaic_0001>

<llo_original>
// kernel: tpu_custom_call.1
$region0: #{tpu_custom_call.1}
  #allocation0 [shape = 'u32[]', space=smem, size = 0x4, offset = 0x4, fixed_abs, tag = 'smem constant byte address 0x4 - core index']
  #allocation1 [shape = 'u32[144,128]{1,0:T(1,128)}', space=vmem, size = 0x12000, scoped, tag = 'internal scratch']
  %s0 = inlined_call_operand.hbm [shape: f32[16,32], index: 0, kind: input, shape index: {}]
  %s1 = inlined_call_operand.hbm [shape: f32[16,32], index: 1, kind: input, shape index: {}]
  %s2 = inlined_call_operand.hbm [shape: f32[16,32], index: 2, kind: input, shape index: {}]
  %s3 = inlined_call_operand.hbm [shape: f32[32,32], index: 3, kind: input, shape index: {}]
  %s4 = inlined_call_operand.hbm [shape: f32[1,32], index: 4, kind: input, shape index: {}]
  %s5 = inlined_call_operand.hbm [shape: f32[32,32], index: 5, kind: input, shape index: {}]
  %s6 = inlined_call_operand.hbm [shape: f32[1,32], index: 6, kind: input, shape index: {}]
  %s7 = inlined_call_operand.hbm [shape: f32[32,32], index: 7, kind: input, shape index: {}]
  %s8 = inlined_call_operand.hbm [shape: f32[1,32], index: 8, kind: input, shape index: {}]
  %s9 = inlined_call_operand.hbm [shape: f32[16,32], index: 9, kind: output, shape index: {0}]
  %s10 = inlined_call_operand.hbm [shape: f32[16,32], index: 10, kind: output, shape index: {1}]
  %s11 = inlined_call_operand.hbm [shape: f32[16,32], index: 11, kind: output, shape index: {2}]
  %12 = xla_tuple %s9, %s10, %s11
  %s13 = sld [smem:[#allocation0]]
  $region121: #{tpu_custom_call.1} parent=0
    _
  %s15 = ssub.s32 1, %s13
  %s16 = scalar_select 0, %s15, %s13
  $region1: #{tpu_custom_call.1} parent=0
    #allocation2 [shape = 'u8[8192]{0}', space=vmem, size = 0x2000, scoped, tag = 'input window, operand 0']
    #allocation3 [shape = 's32[2]{0}', space=sflag, size = 0x8, scoped, tag = 'scoped memory for tpu_custom_call.1']
    #allocation4 [shape = 's32[2]{0}', space=sflag, size = 0x8, scoped, tag = 'scoped memory for tpu_custom_call.1']
    #allocation5 [shape = 'u8[8192]{0}', space=vmem, size = 0x2000, scoped, tag = 'input window, operand 1']
    #allocation6 [shape = 's32[2]{0}', space=sflag, size = 0x8, scoped, tag = 'scoped memory for tpu_custom_call.1']
    #allocation7 [shape = 'u8[8192]{0}', space=vmem, size = 0x2000, scoped, tag = 'input window, operand 2']
    #allocation8 [shape = 'u8[16384]{0}', space=vmem, size = 0x4000, scoped, tag = 'input window, operand 3, single buffered']
    #allocation9 [shape = 's32[1]{0}', space=sflag, size = 0x4, scoped, tag = 'scoped memory for tpu_custom_call.1']
    #allocation10 [shape = 'u8[512]{0}', space=vmem, size = 0x400, scoped, tag = 'input window, operand 4, single buffered']
    #allocation11 [shape = 'u8[16384]{0}', space=vmem, size = 0x4000, scoped, tag = 'input window, operand 5, single buffered']
    #allocation12 [shape = 's32[1]{0}', space=sflag, size = 0x4, scoped, tag = 'scoped memory for tpu_custom_call.1']
    #allocation13 [shape = 'u8[512]{0}', space=vmem, size = 0x400, scoped, tag = 'input window, operand 6, single buffered']
    #allocation14 [shape = 'u8[16384]{0}', space=vmem, size = 0x4000, scoped, tag = 'input window, operand 7, single buffered']
    #allocation15 [shape = 's32[1]{0}', space=sflag, size = 0x4, scoped, tag = 'scoped memory for tpu_custom_call.1']
    #allocation16 [shape = 'u8[512]{0}', space=vmem, size = 0x400, scoped, tag = 'input window, operand 8, single buffered']
    #allocation17 [shape = 'u8[8192]{0}', space=vmem, size = 0x2000, scoped, tag = 'output window, operand 0']
    #allocation18 [shape = 'u8[8192]{0}', space=vmem, size = 0x2000, scoped, tag = 'output window, operand 1']
    #allocation19 [shape = 's32[2]{0}', space=sflag, size = 0x8, scoped, tag = 'scoped memory for tpu_custom_call.1']
    #allocation20 [shape = 'u8[8192]{0}', space=vmem, size = 0x2000, scoped, tag = 'output window, operand 2']
    %17 = vsyncpa [#allocation3], 0
    %s18 = scalar_lea.sflag [#allocation3], 1
    %19 = vsyncpa %s18, 0
    %20 = vsyncpa [#allocation6], 0
    %s21 = scalar_lea.sflag [#allocation6], 1
    %22 = vsyncpa %s21, 0
    %23 = vsyncpa [#allocation9], 0
    %24 = vsyncpa [#allocation12], 0
    %25 = vsyncpa [#allocation15], 0
    %26 = vsyncpa [#allocation4], 0
    %s27 = scalar_lea.sflag [#allocation4], 1
    %28 = vsyncpa %s27, 0
    %29 = vsyncpa [#allocation19], 0
    %s30 = scalar_lea.sflag [#allocation19], 1
    %31 = vsyncpa %s30, 0
    loop: start=0, step=1, limit=4
    $region2: #{tpu_custom_call.1} parent=1 // loop_pre_header
      _
    $region3: #{tpu_custom_call.1} parent=1 // loop_header
      %s33 = sphi 0, %s37
      %p34 = scmp.ge.s32.totalorder %s33, 4
      %s43 = sphi 0, %s45
      %s46 = sphi 0, %s43
      %s47 = sphi 0, %s46
      %s63 = sphi 0, %s47
      %s69 = sphi 0, %s71
      %s72 = sphi 0, %s69
      %s73 = sphi 0, %s72
      %s89 = sphi 0, %s73
      %s95 = sphi 0, %s97
      %s98 = sphi 0, %s95
      %s99 = sphi 0, %s98
      %s115 = sphi 0, %s99
      %s119 = sphi 0, %s119
      %s121 = sphi 0, %s119
      %s122 = sphi 0, %s121
      %s136 = sphi 0, %s122
      %s140 = sphi 0, %s140
      %s142 = sphi 0, %s140
      %s143 = sphi 0, %s142
      %s157 = sphi 0, %s143
      %s161 = sphi 0, %s161
      %s163 = sphi 0, %s161
      %s164 = sphi 0, %s163
      %s178 = sphi 0, %s164
      %s182 = sphi 0, %s182
      %s184 = sphi 0, %s182
      %s185 = sphi 0, %s184
      %s199 = sphi 0, %s185
      %s203 = sphi 0, %s203
      %s205 = sphi 0, %s203
      %s206 = sphi 0, %s205
      %s220 = sphi 0, %s206
      %s224 = sphi 0, %s224
      %s226 = sphi 0, %s224
      %s227 = sphi 0, %s226
      %s241 = sphi 0, %s227
      %s247 = sphi 0, %s249
      %s250 = sphi 0, %s247
      %s251 = sphi 0, %s250
      %s267 = sphi 0, %s251
      %s273 = sphi 0, %s275
      %s276 = sphi 0, %s273
      %s277 = sphi 0, %s276
      %s293 = sphi 0, %s277
      %s299 = sphi 0, %s301
      %s302 = sphi 0, %s299
      %s303 = sphi 0, %s302
      %s319 = sphi 0, %s303
    $region4: #{tpu_custom_call.1} parent=1 // loop_header_branch
      %36 = sbr.rel (%p34) target = $region8
    $region5: #{tpu_custom_call.1} parent=1 // loop_body
      %s38 = ssub.s32 %s33, 1
      %s39 = ssub.s32 %s33, 2
      %s40 = sadd.s32 %s33, 1
      %s41 = ssub.s32 %s33, %s40
      %p42 = scmp.eq.s32.totalorder %s41, 0
      %s44 = sadd.s32 %s43, 1
      %s45 = scalar_select %p42, %s43, %s44
      %p48 = pneg %p42
      %p49 = scmp.eq.s32.totalorder %s33, 1
      %p50 = por %p48, %p49
      %p51 = scmp.ne.s32.totalorder %s43, %s46
      %p52 = scmp.eq.s32.totalorder %s33, 0
      %p53 = por %p51, %p52
      %p54 = scmp.ne.s32.totalorder %s43, %s46
      %p55 = scmp.eq.s32.totalorder %s38, 1
      %p56 = por %p54, %p55
      %p57 = scmp.ne.s32.totalorder %s46, %s47
      %p58 = scmp.eq.s32.totalorder %s38, 0
      %p59 = por %p57, %p58
      %p60 = scmp.ne.s32.totalorder %s46, %s47
      %p61 = scmp.eq.s32.totalorder %s39, 1
      %p62 = por %p60, %p61
      %p64 = scmp.ne.s32.totalorder %s47, %s63
      %p65 = scmp.eq.s32.totalorder %s39, 0
      %p66 = por %p64, %p65
      %s67 = ssub.s32 %s33, %s40
      %p68 = scmp.eq.s32.totalorder %s67, 0
      %s70 = sadd.s32 %s69, 1
      %s71 = scalar_select %p68, %s69, %s70
      %p74 = pneg %p68
      %p75 = scmp.eq.s32.totalorder %s33, 1
      %p76 = por %p74, %p75
      %p77 = scmp.ne.s32.totalorder %s69, %s72
      %p78 = scmp.eq.s32.totalorder %s33, 0
      %p79 = por %p77, %p78
      %p80 = scmp.ne.s32.totalorder %s69, %s72
      %p81 = scmp.eq.s32.totalorder %s38, 1
      %p82 = por %p80, %p81
      %p83 = scmp.ne.s32.totalorder %s72, %s73
      %p84 = scmp.eq.s32.totalorder %s38, 0
      %p85 = por %p83, %p84
      %p86 = scmp.ne.s32.totalorder %s72, %s73
      %p87 = scmp.eq.s32.totalorder %s39, 1
      %p88 = por %p86, %p87
      %p90 = scmp.ne.s32.totalorder %s73, %s89
      %p91 = scmp.eq.s32.totalorder %s39, 0
      %p92 = por %p90, %p91
      %s93 = ssub.s32 %s33, %s40
      %p94 = scmp.eq.s32.totalorder %s93, 0
      %s96 = sadd.s32 %s95, 1
      %s97 = scalar_select %p94, %s95, %s96
      %p100 = pneg %p94
      %p101 = scmp.eq.s32.totalorder %s33, 1
      %p102 = por %p100, %p101
      %p103 = scmp.ne.s32.totalorder %s95, %s98
      %p104 = scmp.eq.s32.totalorder %s33, 0
      %p105 = por %p103, %p104
      %p106 = scmp.ne.s32.totalorder %s95, %s98
      %p107 = scmp.eq.s32.totalorder %s38, 1
      %p108 = por %p106, %p107
      %p109 = scmp.ne.s32.totalorder %s98, %s99
      %p110 = scmp.eq.s32.totalorder %s38, 0
      %p111 = por %p109, %p110
      %p112 = scmp.ne.s32.totalorder %s98, %s99
      %p113 = scmp.eq.s32.totalorder %s39, 1
      %p114 = por %p112, %p113
      %p116 = scmp.ne.s32.totalorder %s99, %s115
      %p117 = scmp.eq.s32.totalorder %s39, 0
      %p118 = por %p116, %p117
      %s120 = sadd.s32 %s119, 1
      %p123 = scmp.eq.s32.totalorder %s33, 1
      %p124 = scmp.ne.s32.totalorder %s119, %s121
      %p125 = scmp.eq.s32.totalorder %s33, 0
      %p126 = por %p124, %p125
      %p127 = scmp.ne.s32.totalorder %s119, %s121
      %p128 = scmp.eq.s32.totalorder %s38, 1
      %p129 = por %p127, %p128
      %p130 = scmp.ne.s32.totalorder %s121, %s122
      %p131 = scmp.eq.s32.totalorder %s38, 0
      %p132 = por %p130, %p131
      %p133 = scmp.ne.s32.totalorder %s121, %s122
      %p134 = scmp.eq.s32.totalorder %s39, 1
      %p135 = por %p133, %p134
      %p137 = scmp.ne.s32.totalorder %s122, %s136
      %p138 = scmp.eq.s32.totalorder %s39, 0
      %p139 = por %p137, %p138
      %s141 = sadd.s32 %s140, 1
      %p144 = scmp.eq.s32.totalorder %s33, 1
      %p145 = scmp.ne.s32.totalorder %s140, %s142
      %p146 = scmp.eq.s32.totalorder %s33, 0
      %p147 = por %p145, %p146
      %p148 = scmp.ne.s32.totalorder %s140, %s142
      %p149 = scmp.eq.s32.totalorder %s38, 1
      %p150 = por %p148, %p149
      %p151 = scmp.ne.s32.totalorder %s142, %s143
      %p152 = scmp.eq.s32.totalorder %s38, 0
      %p153 = por %p151, %p152
      %p154 = scmp.ne.s32.totalorder %s142, %s143
      %p155 = scmp.eq.s32.totalorder %s39, 1
      %p156 = por %p154, %p155
      %p158 = scmp.ne.s32.totalorder %s143, %s157
      %p159 = scmp.eq.s32.totalorder %s39, 0
      %p160 = por %p158, %p159
      %s162 = sadd.s32 %s161, 1
      %p165 = scmp.eq.s32.totalorder %s33, 1
      %p166 = scmp.ne.s32.totalorder %s161, %s163
      %p167 = scmp.eq.s32.totalorder %s33, 0
      %p168 = por %p166, %p167
      %p169 = scmp.ne.s32.totalorder %s161, %s163
      %p170 = scmp.eq.s32.totalorder %s38, 1
      %p171 = por %p169, %p170
      %p172 = scmp.ne.s32.totalorder %s163, %s164
      %p173 = scmp.eq.s32.totalorder %s38, 0
      %p174 = por %p172, %p173
      %p175 = scmp.ne.s32.totalorder %s163, %s164
      %p176 = scmp.eq.s32.totalorder %s39, 1
      %p177 = por %p175, %p176
      %p179 = scmp.ne.s32.totalorder %s164, %s178
      %p180 = scmp.eq.s32.totalorder %s39, 0
      %p181 = por %p179, %p180
      %s183 = sadd.s32 %s182, 1
      %p186 = scmp.eq.s32.totalorder %s33, 1
      %p187 = scmp.ne.s32.totalorder %s182, %s184
      %p188 = scmp.eq.s32.totalorder %s33, 0
      %p189 = por %p187, %p188
      %p190 = scmp.ne.s32.totalorder %s182, %s184
      %p191 = scmp.eq.s32.totalorder %s38, 1
      %p192 = por %p190, %p191
      %p193 = scmp.ne.s32.totalorder %s184, %s185
      %p194 = scmp.eq.s32.totalorder %s38, 0
      %p195 = por %p193, %p194
      %p196 = scmp.ne.s32.totalorder %s184, %s185
      %p197 = scmp.eq.s32.totalorder %s39, 1
      %p198 = por %p196, %p197
      %p200 = scmp.ne.s32.totalorder %s185, %s199
      %p201 = scmp.eq.s32.totalorder %s39, 0
      %p202 = por %p200, %p201
      %s204 = sadd.s32 %s203, 1
      %p207 = scmp.eq.s32.totalorder %s33, 1
      %p208 = scmp.ne.s32.totalorder %s203, %s205
      %p209 = scmp.eq.s32.totalorder %s33, 0
      %p210 = por %p208, %p209
      %p211 = scmp.ne.s32.totalorder %s203, %s205
      %p212 = scmp.eq.s32.totalorder %s38, 1
      %p213 = por %p211, %p212
      %p214 = scmp.ne.s32.totalorder %s205, %s206
      %p215 = scmp.eq.s32.totalorder %s38, 0
      %p216 = por %p214, %p215
      %p217 = scmp.ne.s32.totalorder %s205, %s206
      %p218 = scmp.eq.s32.totalorder %s39, 1
      %p219 = por %p217, %p218
      %p221 = scmp.ne.s32.totalorder %s206, %s220
      %p222 = scmp.eq.s32.totalorder %s39, 0
      %p223 = por %p221, %p222
      %s225 = sadd.s32 %s224, 1
      %p228 = scmp.eq.s32.totalorder %s33, 1
      %p229 = scmp.ne.s32.totalorder %s224, %s226
      %p230 = scmp.eq.s32.totalorder %s33, 0
      %p231 = por %p229, %p230
      %p232 = scmp.ne.s32.totalorder %s224, %s226
      %p233 = scmp.eq.s32.totalorder %s38, 1
      %p234 = por %p232, %p233
      %p235 = scmp.ne.s32.totalorder %s226, %s227
      %p236 = scmp.eq.s32.totalorder %s38, 0
      %p237 = por %p235, %p236
      %p238 = scmp.ne.s32.totalorder %s226, %s227
      %p239 = scmp.eq.s32.totalorder %s39, 1
      %p240 = por %p238, %p239
      %p242 = scmp.ne.s32.totalorder %s227, %s241
      %p243 = scmp.eq.s32.totalorder %s39, 0
      %p244 = por %p242, %p243
      %s245 = ssub.s32 %s33, %s40
      %p246 = scmp.eq.s32.totalorder %s245, 0
      %s248 = sadd.s32 %s247, 1
      %s249 = scalar_select %p246, %s247, %s248
      %p252 = pneg %p246
      %p253 = scmp.eq.s32.totalorder %s33, 1
      %p254 = por %p252, %p253
      %p255 = scmp.ne.s32.totalorder %s247, %s250
      %p256 = scmp.eq.s32.totalorder %s33, 0
      %p257 = por %p255, %p256
      %p258 = scmp.ne.s32.totalorder %s247, %s250
      %p259 = scmp.eq.s32.totalorder %s38, 1
      %p260 = por %p258, %p259
      %p261 = scmp.ne.s32.totalorder %s250, %s251
      %p262 = scmp.eq.s32.totalorder %s38, 0
      %p263 = por %p261, %p262
      %p264 = scmp.ne.s32.totalorder %s250, %s251
      %p265 = scmp.eq.s32.totalorder %s39, 1
      %p266 = por %p264, %p265
      %p268 = scmp.ne.s32.totalorder %s251, %s267
      %p269 = scmp.eq.s32.totalorder %s39, 0
      %p270 = por %p268, %p269
      %s271 = ssub.s32 %s33, %s40
      %p272 = scmp.eq.s32.totalorder %s271, 0
      %s274 = sadd.s32 %s273, 1
      %s275 = scalar_select %p272, %s273, %s274
      %p278 = pneg %p272
      %p279 = scmp.eq.s32.totalorder %s33, 1
      %p280 = por %p278, %p279
      %p281 = scmp.ne.s32.totalorder %s273, %s276
      %p282 = scmp.eq.s32.totalorder %s33, 0
      %p283 = por %p281, %p282
      %p284 = scmp.ne.s32.totalorder %s273, %s276
      %p285 = scmp.eq.s32.totalorder %s38, 1
      %p286 = por %p284, %p285
      %p287 = scmp.ne.s32.totalorder %s276, %s277
      %p288 = scmp.eq.s32.totalorder %s38, 0
      %p289 = por %p287, %p288
      %p290 = scmp.ne.s32.totalorder %s276, %s277
      %p291 = scmp.eq.s32.totalorder %s39, 1
      %p292 = por %p290, %p291
      %p294 = scmp.ne.s32.totalorder %s277, %s293
      %p295 = scmp.eq.s32.totalorder %s39, 0
      %p296 = por %p294, %p295
      %s297 = ssub.s32 %s33, %s40
      %p298 = scmp.eq.s32.totalorder %s297, 0
      %s300 = sadd.s32 %s299, 1
      %s301 = scalar_select %p298, %s299, %s300
      %p304 = pneg %p298
      %p305 = scmp.eq.s32.totalorder %s33, 1
      %p306 = por %p304, %p305
      %p307 = scmp.ne.s32.totalorder %s299, %s302
      %p308 = scmp.eq.s32.totalorder %s33, 0
      %p309 = por %p307, %p308
      %p310 = scmp.ne.s32.totalorder %s299, %s302
      %p311 = scmp.eq.s32.totalorder %s38, 1
      %p312 = por %p310, %p311
      %p313 = scmp.ne.s32.totalorder %s302, %s303
      %p314 = scmp.eq.s32.totalorder %s38, 0
      %p315 = por %p313, %p314
      %p316 = scmp.ne.s32.totalorder %s302, %s303
      %p317 = scmp.eq.s32.totalorder %s39, 1
      %p318 = por %p316, %p317
      %p320 = scmp.ne.s32.totalorder %s303, %s319
      %p321 = scmp.eq.s32.totalorder %s39, 0
      %p322 = por %p320, %p321
      %p323 = scmp.le.s32.totalorder 1, %s33
      %p324 = scmp.lt.s32.totalorder %s33, 3
      %p325 = pnand %p323, %p324
      %p326 = pneg %p325
      // Predicated region
      $region9: #{tpu_custom_call.1} parent=5 // pred_check
        _
      $region10: #{tpu_custom_call.1} parent=5 // pred_check_branch
        %328 = sbr.rel (%p325) target = $region12
      $region11: #{tpu_custom_call.1} parent=5 // pred_region
        %s329 = ssub.s32 %s33, 1
        // Predicated region
        $region13: #{tpu_custom_call.1} parent=11 // pred_check
          %p330 = pneg %p132
        $region14: #{tpu_custom_call.1} parent=11 // pred_check_branch
          %332 = sbr.rel (%p330) target = $region16
        $region15: #{tpu_custom_call.1} parent=11 // pred_region
          %s334 = ssub.s32 512, 512
          %335 = vsyncadd [#allocation9], %s334
          %s336 = sshll.u32 [#allocation8], 4
          %s337 = int_to_ptr.vmem [resolvable:$true] %s336
          %342 = dma.hbm_to_vmem [thread:$0]  %s3, 512, %s337, [#allocation9], 128, 128, 8
        $region16: #{tpu_custom_call.1} parent=11 // pred_fallthru
          _
        // Predicated region
        $region17: #{tpu_custom_call.1} parent=11 // pred_check
          %p343 = pneg %p153
        $region18: #{tpu_custom_call.1} parent=11 // pred_check_branch
          %345 = sbr.rel (%p343) target = $region20
        $region19: #{tpu_custom_call.1} parent=11 // pred_region
          %s347 = ssub.s32 16, 16
          %348 = vsyncadd [#allocation9], %s347
          %s350 = sshll.u32 [#allocation10], 4
          %s351 = int_to_ptr.vmem [resolvable:$true] %s350
          %353 = dma.hbm_to_vmem [thread:$0]  %s4, 16, %s351, [#allocation9]
        $region20: #{tpu_custom_call.1} parent=11 // pred_fallthru
          _
        // Predicated region
        $region21: #{tpu_custom_call.1} parent=11 // pred_check
          %p354 = pneg %p174
        $region22: #{tpu_custom_call.1} parent=11 // pred_check_branch
          %356 = sbr.rel (%p354) target = $region24
        $region23: #{tpu_custom_call.1} parent=11 // pred_region
          %s358 = ssub.s32 512, 512
          %359 = vsyncadd [#allocation12], %s358
          %s360 = sshll.u32 [#allocation11], 4
          %s361 = int_to_ptr.vmem [resolvable:$true] %s360
          %366 = dma.hbm_to_vmem [thread:$0]  %s5, 512, %s361, [#allocation12], 128, 128, 8
        $region24: #{tpu_custom_call.1} parent=11 // pred_fallthru
          _
        // Predicated region
        $region25: #{tpu_custom_call.1} parent=11 // pred_check
          %p367 = pneg %p195
        $region26: #{tpu_custom_call.1} parent=11 // pred_check_branch
          %369 = sbr.rel (%p367) target = $region28
        $region27: #{tpu_custom_call.1} parent=11 // pred_region
          %s371 = ssub.s32 16, 16
          %372 = vsyncadd [#allocation12], %s371
          %s374 = sshll.u32 [#allocation13], 4
          %s375 = int_to_ptr.vmem [resolvable:$true] %s374
          %377 = dma.hbm_to_vmem [thread:$0]  %s6, 16, %s375, [#allocation12]
        $region28: #{tpu_custom_call.1} parent=11 // pred_fallthru
          _
        // Predicated region
        $region29: #{tpu_custom_call.1} parent=11 // pred_check
          %p378 = pneg %p216
        $region30: #{tpu_custom_call.1} parent=11 // pred_check_branch
          %380 = sbr.rel (%p378) target = $region32
        $region31: #{tpu_custom_call.1} parent=11 // pred_region
          %s382 = ssub.s32 512, 512
          %383 = vsyncadd [#allocation15], %s382
          %s384 = sshll.u32 [#allocation14], 4
          %s385 = int_to_ptr.vmem [resolvable:$true] %s384
          %390 = dma.hbm_to_vmem [thread:$0]  %s7, 512, %s385, [#allocation15], 128, 128, 8
        $region32: #{tpu_custom_call.1} parent=11 // pred_fallthru
          _
        // Predicated region
        $region33: #{tpu_custom_call.1} parent=11 // pred_check
          %p391 = pneg %p237
        $region34: #{tpu_custom_call.1} parent=11 // pred_check_branch
          %393 = sbr.rel (%p391) target = $region36
        $region35: #{tpu_custom_call.1} parent=11 // pred_region
          %s395 = ssub.s32 16, 16
          %396 = vsyncadd [#allocation15], %s395
          %s398 = sshll.u32 [#allocation16], 4
          %s399 = int_to_ptr.vmem [resolvable:$true] %s398
          %401 = dma.hbm_to_vmem [thread:$0]  %s8, 16, %s399, [#allocation15]
        $region36: #{tpu_custom_call.1} parent=11 // pred_fallthru
          _
      $region12: #{tpu_custom_call.1} parent=5 // pred_fallthru
        _
      %p402 = scmp.lt.s32.totalorder %s33, 2
      // Predicated region
      $region37: #{tpu_custom_call.1} parent=5 // pred_check
        %p403 = pneg %p402
      $region38: #{tpu_custom_call.1} parent=5 // pred_check_branch
        %405 = sbr.rel (%p403) target = $region40
      $region39: #{tpu_custom_call.1} parent=5 // pred_region
        // Predicated region
        $region41: #{tpu_custom_call.1} parent=39 // pred_check
          %p406 = pneg %p53
        $region42: #{tpu_custom_call.1} parent=39 // pred_check_branch
          %408 = sbr.rel (%p406) target = $region44
        $region43: #{tpu_custom_call.1} parent=39 // pred_region
          %s409 = sand.u32 %s43, 1
          %s410 = scalar_lea.sflag [#allocation3], %s409
          %s411 = sand.u32 %s43, 1
          %s412 = smul.addr %s411, 8
          %s413 = scalar_lea.vmem [#allocation2], %s412
          %s415 = ssub.s32 128, 128
          %416 = vsyncadd %s410, %s415
          %s417 = smul.addr %s33, 128
          %s418 = scalar_lea.hbm %s0, %s417
          %s420 = sshll.u32 %s413, 4
          %s421 = int_to_ptr.vmem [resolvable:$true] %s420
          %423 = dma.hbm_to_vmem [thread:$0]  %s418, 128, %s421, %s410
        $region44: #{tpu_custom_call.1} parent=39 // pred_fallthru
          _
        // Predicated region
        $region45: #{tpu_custom_call.1} parent=39 // pred_check
          %p424 = pneg %p79
        $region46: #{tpu_custom_call.1} parent=39 // pred_check_branch
          %426 = sbr.rel (%p424) target = $region48
        $region47: #{tpu_custom_call.1} parent=39 // pred_region
          %s427 = sand.u32 %s33, 1
          %s428 = scalar_lea.sflag [#allocation6], %s427
          %s429 = sand.u32 %s69, 1
          %s430 = smul.addr %s429, 8
          %s431 = scalar_lea.vmem [#allocation5], %s430
          %s433 = ssub.s32 128, 128
          %434 = vsyncadd %s428, %s433
          %s435 = smul.addr %s33, 128
          %s436 = scalar_lea.hbm %s1, %s435
          %s438 = sshll.u32 %s431, 4
          %s439 = int_to_ptr.vmem [resolvable:$true] %s438
          %441 = dma.hbm_to_vmem [thread:$0]  %s436, 128, %s439, %s428
        $region48: #{tpu_custom_call.1} parent=39 // pred_fallthru
          _
        // Predicated region
        $region49: #{tpu_custom_call.1} parent=39 // pred_check
          %p442 = pneg %p105
        $region50: #{tpu_custom_call.1} parent=39 // pred_check_branch
          %444 = sbr.rel (%p442) target = $region52
        $region51: #{tpu_custom_call.1} parent=39 // pred_region
          %s445 = sand.u32 %s33, 1
          %s446 = scalar_lea.sflag [#allocation6], %s445
          %s447 = sand.u32 %s95, 1
          %s448 = smul.addr %s447, 8
          %s449 = scalar_lea.vmem [#allocation7], %s448
          %s451 = ssub.s32 128, 128
          %452 = vsyncadd %s446, %s451
          %s453 = smul.addr %s33, 128
          %s454 = scalar_lea.hbm %s2, %s453
          %s456 = sshll.u32 %s449, 4
          %s457 = int_to_ptr.vmem [resolvable:$true] %s456
          %459 = dma.hbm_to_vmem [thread:$0]  %s454, 128, %s457, %s446
        $region52: #{tpu_custom_call.1} parent=39 // pred_fallthru
          _
      $region40: #{tpu_custom_call.1} parent=5 // pred_fallthru
        _
      %p460 = scmp.le.s32.totalorder 1, %s33
      %p461 = scmp.lt.s32.totalorder %s33, 3
      %p462 = pnand %p460, %p461
      %p463 = pneg %p462
      // Predicated region
      $region53: #{tpu_custom_call.1} parent=5 // pred_check
        _
      $region54: #{tpu_custom_call.1} parent=5 // pred_check_branch
        %465 = sbr.rel (%p462) target = $region56
      $region55: #{tpu_custom_call.1} parent=5 // pred_region
        %s466 = ssub.s32 %s33, 1
        %s467 = sand.u32 %s46, 1
        %s468 = scalar_lea.sflag [#allocation3], %s467
        %s469 = sand.u32 %s46, 1
        %s470 = smul.addr %s469, 8
        %s471 = scalar_lea.vmem [#allocation2], %s470
        // Predicated region
        $region57: #{tpu_custom_call.1} parent=55 // pred_check
          %p472 = pneg %p59
        $region58: #{tpu_custom_call.1} parent=55 // pred_check_branch
          %474 = sbr.rel (%p472) target = $region60
        $region59: #{tpu_custom_call.1} parent=55 // pred_region
          %475 = dma.done %s468, 128
        $region60: #{tpu_custom_call.1} parent=55 // pred_fallthru
          _
        %s476 = sand.u32 %s38, 1
        %s477 = scalar_lea.sflag [#allocation6], %s476
        %s478 = sand.u32 %s72, 1
        %s479 = smul.addr %s478, 8
        %s480 = scalar_lea.vmem [#allocation5], %s479
        // Predicated region
        $region61: #{tpu_custom_call.1} parent=55 // pred_check
          %p481 = pneg %p85
        $region62: #{tpu_custom_call.1} parent=55 // pred_check_branch
          %483 = sbr.rel (%p481) target = $region64
        $region63: #{tpu_custom_call.1} parent=55 // pred_region
          %484 = dma.done %s477, 128
        $region64: #{tpu_custom_call.1} parent=55 // pred_fallthru
          _
        %s485 = sand.u32 %s38, 1
        %s486 = scalar_lea.sflag [#allocation6], %s485
        %s487 = sand.u32 %s98, 1
        %s488 = smul.addr %s487, 8
        %s489 = scalar_lea.vmem [#allocation7], %s488
        // Predicated region
        $region65: #{tpu_custom_call.1} parent=55 // pred_check
          %p490 = pneg %p111
        $region66: #{tpu_custom_call.1} parent=55 // pred_check_branch
          %492 = sbr.rel (%p490) target = $region68
        $region67: #{tpu_custom_call.1} parent=55 // pred_region
          %493 = dma.done %s486, 128
        $region68: #{tpu_custom_call.1} parent=55 // pred_fallthru
          _
        // Predicated region
        $region69: #{tpu_custom_call.1} parent=55 // pred_check
          %p494 = pneg %p132
        $region70: #{tpu_custom_call.1} parent=55 // pred_check_branch
          %496 = sbr.rel (%p494) target = $region72
        $region71: #{tpu_custom_call.1} parent=55 // pred_region
          %497 = dma.done [#allocation9], 512
        $region72: #{tpu_custom_call.1} parent=55 // pred_fallthru
          _
        // Predicated region
        $region73: #{tpu_custom_call.1} parent=55 // pred_check
          %p498 = pneg %p153
        $region74: #{tpu_custom_call.1} parent=55 // pred_check_branch
          %500 = sbr.rel (%p498) target = $region76
        $region75: #{tpu_custom_call.1} parent=55 // pred_region
          %501 = dma.done [#allocation9], 16
        $region76: #{tpu_custom_call.1} parent=55 // pred_fallthru
          _
        // Predicated region
        $region77: #{tpu_custom_call.1} parent=55 // pred_check
          %p502 = pneg %p174
        $region78: #{tpu_custom_call.1} parent=55 // pred_check_branch
          %504 = sbr.rel (%p502) target = $region80
        $region79: #{tpu_custom_call.1} parent=55 // pred_region
          %505 = dma.done [#allocation12], 512
        $region80: #{tpu_custom_call.1} parent=55 // pred_fallthru
          _
        // Predicated region
        $region81: #{tpu_custom_call.1} parent=55 // pred_check
          %p506 = pneg %p195
        $region82: #{tpu_custom_call.1} parent=55 // pred_check_branch
          %508 = sbr.rel (%p506) target = $region84
        $region83: #{tpu_custom_call.1} parent=55 // pred_region
          %509 = dma.done [#allocation12], 16
        $region84: #{tpu_custom_call.1} parent=55 // pred_fallthru
          _
        // Predicated region
        $region85: #{tpu_custom_call.1} parent=55 // pred_check
          %p510 = pneg %p216
        $region86: #{tpu_custom_call.1} parent=55 // pred_check_branch
          %512 = sbr.rel (%p510) target = $region88
        $region87: #{tpu_custom_call.1} parent=55 // pred_region
          %513 = dma.done [#allocation15], 512
        $region88: #{tpu_custom_call.1} parent=55 // pred_fallthru
          _
        // Predicated region
        $region89: #{tpu_custom_call.1} parent=55 // pred_check
          %p514 = pneg %p237
        $region90: #{tpu_custom_call.1} parent=55 // pred_check_branch
          %516 = sbr.rel (%p514) target = $region92
        $region91: #{tpu_custom_call.1} parent=55 // pred_region
          %517 = dma.done [#allocation15], 16
        $region92: #{tpu_custom_call.1} parent=55 // pred_fallthru
          _
        %s518 = sand.u32 %s46, 1
        %s519 = scalar_lea.sflag [#allocation3], %s518
        %s520 = sand.u32 %s46, 1
        %s521 = smul.addr %s520, 8
        %s522 = scalar_lea.vmem [#allocation2], %s521
        %p523 = pneg %p59
        %p524 = pneg %p56
        %s525 = sand.u32 %s38, 1
        %s526 = scalar_lea.sflag [#allocation6], %s525
        %s527 = sand.u32 %s72, 1
        %s528 = smul.addr %s527, 8
        %s529 = scalar_lea.vmem [#allocation5], %s528
        %p530 = pneg %p85
        %p531 = pneg %p82
        %s532 = sand.u32 %s38, 1
        %s533 = scalar_lea.sflag [#allocation6], %s532
        %s534 = sand.u32 %s98, 1
        %s535 = smul.addr %s534, 8
        %s536 = scalar_lea.vmem [#allocation7], %s535
        %p537 = pneg %p111
        %p538 = pneg %p108
        %p539 = pneg %p132
        %p540 = pneg %p129
        %p541 = pneg %p153
        %p542 = pneg %p150
        %p543 = pneg %p174
        %p544 = pneg %p171
        %p545 = pneg %p195
        %p546 = pneg %p192
        %p547 = pneg %p216
        %p548 = pneg %p213
        %p549 = pneg %p237
        %p550 = pneg %p234
        %p551 = pneg %p263
        %p552 = pneg %p260
        %s553 = sand.u32 %s250, 1
        %s554 = scalar_lea.sflag [#allocation4], %s553
        %s555 = sand.u32 %s250, 1
        %s556 = smul.addr %s555, 8
        %s557 = scalar_lea.vmem [#allocation17], %s556
        %p558 = pneg %p289
        %p559 = pneg %p286
        %s560 = sand.u32 %s38, 1
        %s561 = scalar_lea.sflag [#allocation19], %s560
        %s562 = sand.u32 %s276, 1
        %s563 = smul.addr %s562, 8
        %s564 = scalar_lea.vmem [#allocation18], %s563
        %p565 = pneg %p315
        %p566 = pneg %p312
        %s567 = sand.u32 %s38, 1
        %s568 = scalar_lea.sflag [#allocation19], %s567
        %s569 = sand.u32 %s302, 1
        %s570 = smul.addr %s569, 8
        %s571 = scalar_lea.vmem [#allocation20], %s570
        %v572 = vld [vmem:[%s471] sm:$0xff]
        %v573 = vld [vmem:[#allocation8] sm:$0xff]
        %v574 = vld [vmem:[#allocation8 + $0x8] sm:$0xff]
        %v575 = vld [vmem:[#allocation8 + $0x10] sm:$0xff]
        %v576 = vld [vmem:[#allocation8 + $0x18] sm:$0xff]
        %v577 = vld [vmem:[#allocation10] sm:$0x1]
        %v579 = vlaneseq
        %v580 = vshrl.u32 %v579, 7
        %v581 = vsub.s32 0, %v580
        %v582 = vrot.slane %v577, %v581
        %vm584 = vcmask 261120
        %v586 = vsel %vm584, %v572, 0
        %588 = vmatprep.subr.mxu0 0.0
        %589 = vmatpush1.msra.mxu0 %v573
        %590 = vmatprep.subr.mxu0 0.0
        %591 = vmatpush1.msra.mxu0 %v574
        %592 = vmatprep.subr.mxu0 0.0
        %593 = vmatpush1.msra.mxu0 %v575
        %594 = vmatprep.subr.mxu0 0.0
        %595 = vmatpush1.msra.mxu0 %v576
        %596 = vmatprep.subr.mxu0 0.0
        %597 = vmatpush1.msra.mxu0 0.0
        %598 = vmatprep.subr.mxu0 0.0
        %599 = vmatpush1.msra.mxu0 0.0
        %600 = vmatprep.subr.mxu0 0.0
        %601 = vmatpush1.msra.mxu0 0.0
        %602 = vmatprep.subr.mxu0 0.0
        %603 = vmatpush1.msra.mxu0 0.0
        %604 = vmatprep.subr.mxu0 0.0
        %605 = vmatpush1.msra.mxu0 0.0
        %606 = vmatprep.subr.mxu0 0.0
        %607 = vmatpush1.msra.mxu0 0.0
        %608 = vmatprep.subr.mxu0 0.0
        %609 = vmatpush1.msra.mxu0 0.0
        %610 = vmatprep.subr.mxu0 0.0
        %611 = vmatpush1.msra.mxu0 0.0
        %612 = vmatprep.subr.mxu0 0.0
        %613 = vmatpush1.msra.mxu0 0.0
        %614 = vmatprep.subr.mxu0 0.0
        %615 = vmatpush1.msra.mxu0 0.0
        %616 = vmatprep.subr.mxu0 0.0
        %617 = vmatpush1.msra.mxu0 0.0
        %618 = vmatprep.subr.mxu0 0.0
        %619 = vmatpush1.msra.mxu0 0.0
        %620 = vmatprep.subr.mxu0 0.0
        %621 = vmatpush1.msra.mxu0 0.0
        %622 = vmatprep.subr.mxu0 0.0
        %623 = vmatpush1.msra.mxu0 0.0
        %624 = vmatprep.subr.mxu0 0.0
        %625 = vmatpush1.msra.mxu0 0.0
        %626 = vmatprep.subr.mxu0 0.0
        %627 = vmatpush1.msra.mxu0 0.0
        %628 = vmatprep.subr.mxu0 0.0
        %629 = vmatpush1.msra.mxu0 0.0
        %630 = vmatprep.subr.mxu0 0.0
        %631 = vmatpush1.msra.mxu0 0.0
        %632 = vmatprep.subr.mxu0 0.0
        %633 = vmatpush1.msra.mxu0 0.0
        %634 = vmatprep.subr.mxu0 0.0
        %635 = vmatpush1.msra.mxu0 0.0
        %636 = vmatprep.subr.mxu0 0.0
        %637 = vmatpush1.msra.mxu0 0.0
        %638 = vmatprep.subr.mxu0 0.0
        %639 = vmatpush1.msra.mxu0 0.0
        %640 = vmatprep.subr.mxu0 0.0
        %641 = vmatpush1.msra.mxu0 0.0
        %642 = vmatprep.subr.mxu0 0.0
        %643 = vmatpush1.msra.mxu0 0.0
        %644 = vmatprep.subr.mxu0 0.0
        %645 = vmatpush1.msra.mxu0 0.0
        %646 = vmatprep.subr.mxu0 0.0
        %647 = vmatpush1.msra.mxu0 0.0
        %648 = vmatprep.subr.mxu0 0.0
        %649 = vmatpush1.msra.mxu0 0.0
        %650 = vmatprep.subr.mxu0 0.0
        %651 = vmatpush1.msra.mxu0 0.0
        %652 = vmatprep.mubr.f32.mxu0 0.0
        %653 = vmatmul.mubr.f32.gmra.mrb[0].mxu0 %v586
        %v654 = vpop.f32.mrb[0].mxu0
        %v655 = vadd.f32 %v582, %v654
        %v656 = vpop.f32.mrb[0].mxu0
        %657 = vdwg.mxu0
        %658 = vst.msk [vmem:[%s557] sm:$0xff] %vm584, %v655
        %v659 = vld [vmem:[%s480] sm:$0xff]
        %v660 = vld [vmem:[#allocation11] sm:$0xff]
        %v661 = vld [vmem:[#allocation11 + $0x8] sm:$0xff]
        %v662 = vld [vmem:[#allocation11 + $0x10] sm:$0xff]
        %v663 = vld [vmem:[#allocation11 + $0x18] sm:$0xff]
        %v664 = vld [vmem:[#allocation13] sm:$0x1]
        %v666 = vlaneseq
        %v667 = vshrl.u32 %v666, 7
        %v668 = vsub.s32 0, %v667
        %v669 = vrot.slane %v664, %v668
        %v672 = vsel %vm584, %v659, 0
        %674 = vmatprep.subr.mxu0 0.0
        %675 = vmatpush1.msra.mxu0 %v660
        %676 = vmatprep.subr.mxu0 0.0
        %677 = vmatpush1.msra.mxu0 %v661
        %678 = vmatprep.subr.mxu0 0.0
        %679 = vmatpush1.msra.mxu0 %v662
        %680 = vmatprep.subr.mxu0 0.0
        %681 = vmatpush1.msra.mxu0 %v663
        %682 = vmatprep.subr.mxu0 0.0
        %683 = vmatpush1.msra.mxu0 0.0
        %684 = vmatprep.subr.mxu0 0.0
        %685 = vmatpush1.msra.mxu0 0.0
        %686 = vmatprep.subr.mxu0 0.0
        %687 = vmatpush1.msra.mxu0 0.0
        %688 = vmatprep.subr.mxu0 0.0
        %689 = vmatpush1.msra.mxu0 0.0
        %690 = vmatprep.subr.mxu0 0.0
        %691 = vmatpush1.msra.mxu0 0.0
        %692 = vmatprep.subr.mxu0 0.0
        %693 = vmatpush1.msra.mxu0 0.0
        %694 = vmatprep.subr.mxu0 0.0
        %695 = vmatpush1.msra.mxu0 0.0
        %696 = vmatprep.subr.mxu0 0.0
        %697 = vmatpush1.msra.mxu0 0.0
        %698 = vmatprep.subr.mxu0 0.0
        %699 = vmatpush1.msra.mxu0 0.0
        %700 = vmatprep.subr.mxu0 0.0
        %701 = vmatpush1.msra.mxu0 0.0
        %702 = vmatprep.subr.mxu0 0.0
        %703 = vmatpush1.msra.mxu0 0.0
        %704 = vmatprep.subr.mxu0 0.0
        %705 = vmatpush1.msra.mxu0 0.0
        %706 = vmatprep.subr.mxu0 0.0
        %707 = vmatpush1.msra.mxu0 0.0
        %708 = vmatprep.subr.mxu0 0.0
        %709 = vmatpush1.msra.mxu0 0.0
        %710 = vmatprep.subr.mxu0 0.0
        %711 = vmatpush1.msra.mxu0 0.0
        %712 = vmatprep.subr.mxu0 0.0
        %713 = vmatpush1.msra.mxu0 0.0
        %714 = vmatprep.subr.mxu0 0.0
        %715 = vmatpush1.msra.mxu0 0.0
        %716 = vmatprep.subr.mxu0 0.0
        %717 = vmatpush1.msra.mxu0 0.0
        %718 = vmatprep.subr.mxu0 0.0
        %719 = vmatpush1.msra.mxu0 0.0
        %720 = vmatprep.subr.mxu0 0.0
        %721 = vmatpush1.msra.mxu0 0.0
        %722 = vmatprep.subr.mxu0 0.0
        %723 = vmatpush1.msra.mxu0 0.0
        %724 = vmatprep.subr.mxu0 0.0
        %725 = vmatpush1.msra.mxu0 0.0
        %726 = vmatprep.subr.mxu0 0.0
        %727 = vmatpush1.msra.mxu0 0.0
        %728 = vmatprep.subr.mxu0 0.0
        %729 = vmatpush1.msra.mxu0 0.0
        %730 = vmatprep.subr.mxu0 0.0
        %731 = vmatpush1.msra.mxu0 0.0
        %732 = vmatprep.subr.mxu0 0.0
        %733 = vmatpush1.msra.mxu0 0.0
        %734 = vmatprep.subr.mxu0 0.0
        %735 = vmatpush1.msra.mxu0 0.0
        %736 = vmatprep.subr.mxu0 0.0
        %737 = vmatpush1.msra.mxu0 0.0
        %738 = vmatprep.mubr.f32.mxu0 0.0
        %739 = vmatmul.mubr.f32.gmra.mrb[0].mxu0 %v672
        %v740 = vpop.f32.mrb[0].mxu0
        %v741 = vadd.f32 %v669, %v740
        %v742 = vpop.f32.mrb[0].mxu0
        %743 = vdwg.mxu0
        %744 = vst.msk [vmem:[%s564] sm:$0xff] %vm584, %v741
        %v745 = vld [vmem:[%s489] sm:$0xff]
        %v746 = vld [vmem:[#allocation14] sm:$0xff]
        %v747 = vld [vmem:[#allocation14 + $0x8] sm:$0xff]
        %v748 = vld [vmem:[#allocation14 + $0x10] sm:$0xff]
        %v749 = vld [vmem:[#allocation14 + $0x18] sm:$0xff]
        %v750 = vld [vmem:[#allocation16] sm:$0x1]
        %v752 = vlaneseq
        %v753 = vshrl.u32 %v752, 7
        %v754 = vsub.s32 0, %v753
        %v755 = vrot.slane %v750, %v754
        %v758 = vsel %vm584, %v745, 0
        %760 = vmatprep.subr.mxu0 0.0
        %761 = vmatpush1.msra.mxu0 %v746
        %762 = vmatprep.subr.mxu0 0.0
        %763 = vmatpush1.msra.mxu0 %v747
        %764 = vmatprep.subr.mxu0 0.0
        %765 = vmatpush1.msra.mxu0 %v748
        %766 = vmatprep.subr.mxu0 0.0
        %767 = vmatpush1.msra.mxu0 %v749
        %768 = vmatprep.subr.mxu0 0.0
        %769 = vmatpush1.msra.mxu0 0.0
        %770 = vmatprep.subr.mxu0 0.0
        %771 = vmatpush1.msra.mxu0 0.0
        %772 = vmatprep.subr.mxu0 0.0
        %773 = vmatpush1.msra.mxu0 0.0
        %774 = vmatprep.subr.mxu0 0.0
        %775 = vmatpush1.msra.mxu0 0.0
        %776 = vmatprep.subr.mxu0 0.0
        %777 = vmatpush1.msra.mxu0 0.0
        %778 = vmatprep.subr.mxu0 0.0
        %779 = vmatpush1.msra.mxu0 0.0
        %780 = vmatprep.subr.mxu0 0.0
        %781 = vmatpush1.msra.mxu0 0.0
        %782 = vmatprep.subr.mxu0 0.0
        %783 = vmatpush1.msra.mxu0 0.0
        %784 = vmatprep.subr.mxu0 0.0
        %785 = vmatpush1.msra.mxu0 0.0
        %786 = vmatprep.subr.mxu0 0.0
        %787 = vmatpush1.msra.mxu0 0.0
        %788 = vmatprep.subr.mxu0 0.0
        %789 = vmatpush1.msra.mxu0 0.0
        %790 = vmatprep.subr.mxu0 0.0
        %791 = vmatpush1.msra.mxu0 0.0
        %792 = vmatprep.subr.mxu0 0.0
        %793 = vmatpush1.msra.mxu0 0.0
        %794 = vmatprep.subr.mxu0 0.0
        %795 = vmatpush1.msra.mxu0 0.0
        %796 = vmatprep.subr.mxu0 0.0
        %797 = vmatpush1.msra.mxu0 0.0
        %798 = vmatprep.subr.mxu0 0.0
        %799 = vmatpush1.msra.mxu0 0.0
        %800 = vmatprep.subr.mxu0 0.0
        %801 = vmatpush1.msra.mxu0 0.0
        %802 = vmatprep.subr.mxu0 0.0
        %803 = vmatpush1.msra.mxu0 0.0
        %804 = vmatprep.subr.mxu0 0.0
        %805 = vmatpush1.msra.mxu0 0.0
        %806 = vmatprep.subr.mxu0 0.0
        %807 = vmatpush1.msra.mxu0 0.0
        %808 = vmatprep.subr.mxu0 0.0
        %809 = vmatpush1.msra.mxu0 0.0
        %810 = vmatprep.subr.mxu0 0.0
        %811 = vmatpush1.msra.mxu0 0.0
        %812 = vmatprep.subr.mxu0 0.0
        %813 = vmatpush1.msra.mxu0 0.0
        %814 = vmatprep.subr.mxu0 0.0
        %815 = vmatpush1.msra.mxu0 0.0
        %816 = vmatprep.subr.mxu0 0.0
        %817 = vmatpush1.msra.mxu0 0.0
        %818 = vmatprep.subr.mxu0 0.0
        %819 = vmatpush1.msra.mxu0 0.0
        %820 = vmatprep.subr.mxu0 0.0
        %821 = vmatpush1.msra.mxu0 0.0
        %822 = vmatprep.subr.mxu0 0.0
        %823 = vmatpush1.msra.mxu0 0.0
        %824 = vmatprep.mubr.f32.mxu0 0.0
        %825 = vmatmul.mubr.f32.gmra.mrb[0].mxu0 %v758
        %v826 = vpop.f32.mrb[0].mxu0
        %v827 = vadd.f32 %v755, %v826
        %v828 = vpop.f32.mrb[0].mxu0
        %829 = vdwg.mxu0
        %830 = vst.msk [vmem:[%s571] sm:$0xff] %vm584, %v827
        %s831 = sand.u32 %s250, 1
        %s832 = scalar_lea.sflag [#allocation4], %s831
        %s833 = sand.u32 %s250, 1
        %s834 = smul.addr %s833, 8
        %s835 = scalar_lea.vmem [#allocation17], %s834
        %s836 = sand.u32 %s38, 1
        %s837 = scalar_lea.sflag [#allocation19], %s836
        %s838 = sand.u32 %s276, 1
        %s839 = smul.addr %s838, 8
        %s840 = scalar_lea.vmem [#allocation18], %s839
        %s841 = sand.u32 %s38, 1
        %s842 = scalar_lea.sflag [#allocation19], %s841
        %s843 = sand.u32 %s302, 1
        %s844 = smul.addr %s843, 8
        %s845 = scalar_lea.vmem [#allocation20], %s844
        // Predicated region
        $region93: #{tpu_custom_call.1} parent=55 // pred_check
          %p846 = pneg %p260
        $region94: #{tpu_custom_call.1} parent=55 // pred_check_branch
          %848 = sbr.rel (%p846) target = $region96
        $region95: #{tpu_custom_call.1} parent=55 // pred_region
          %s850 = ssub.s32 128, 128
          %851 = vsyncadd %s832, %s850
          %s852 = smul.addr %s38, 128
          %s853 = scalar_lea.hbm %s9, %s852
          %s855 = sshll.u32 %s835, 4
          %s856 = int_to_ptr.vmem [resolvable:$true] %s855
          %858 = dma.vmem_to_hbm [thread:$0]  %s856, 128, %s853, %s832
        $region96: #{tpu_custom_call.1} parent=55 // pred_fallthru
          _
        // Predicated region
        $region97: #{tpu_custom_call.1} parent=55 // pred_check
          %p859 = pneg %p286
        $region98: #{tpu_custom_call.1} parent=55 // pred_check_branch
          %861 = sbr.rel (%p859) target = $region100
        $region99: #{tpu_custom_call.1} parent=55 // pred_region
          %s863 = ssub.s32 128, 128
          %864 = vsyncadd %s837, %s863
          %s865 = smul.addr %s38, 128
          %s866 = scalar_lea.hbm %s10, %s865
          %s868 = sshll.u32 %s840, 4
          %s869 = int_to_ptr.vmem [resolvable:$true] %s868
          %871 = dma.vmem_to_hbm [thread:$0]  %s869, 128, %s866, %s837
        $region100: #{tpu_custom_call.1} parent=55 // pred_fallthru
          _
        // Predicated region
        $region101: #{tpu_custom_call.1} parent=55 // pred_check
          %p872 = pneg %p312
        $region102: #{tpu_custom_call.1} parent=55 // pred_check_branch
          %874 = sbr.rel (%p872) target = $region104
        $region103: #{tpu_custom_call.1} parent=55 // pred_region
          %s876 = ssub.s32 128, 128
          %877 = vsyncadd %s842, %s876
          %s878 = smul.addr %s38, 128
          %s879 = scalar_lea.hbm %s11, %s878
          %s881 = sshll.u32 %s845, 4
          %s882 = int_to_ptr.vmem [resolvable:$true] %s881
          %884 = dma.vmem_to_hbm [thread:$0]  %s882, 128, %s879, %s842
        $region104: #{tpu_custom_call.1} parent=55 // pred_fallthru
          _
      $region56: #{tpu_custom_call.1} parent=5 // pred_fallthru
        _
      %p885 = scmp.le.s32.totalorder 2, %s33
      // Predicated region
      $region105: #{tpu_custom_call.1} parent=5 // pred_check
        %p886 = pneg %p885
      $region106: #{tpu_custom_call.1} parent=5 // pred_check_branch
        %888 = sbr.rel (%p886) target = $region108
      $region107: #{tpu_custom_call.1} parent=5 // pred_region
        %s889 = ssub.s32 %s33, 2
        // Predicated region
        $region109: #{tpu_custom_call.1} parent=107 // pred_check
          %p890 = pneg %p266
        $region110: #{tpu_custom_call.1} parent=107 // pred_check_branch
          %892 = sbr.rel (%p890) target = $region112
        $region111: #{tpu_custom_call.1} parent=107 // pred_region
          %s893 = sand.u32 %s251, 1
          %s894 = scalar_lea.sflag [#allocation4], %s893
          %s895 = sand.u32 %s251, 1
          %s896 = smul.addr %s895, 8
          %s897 = scalar_lea.vmem [#allocation17], %s896
          %898 = dma.done %s894, 128
        $region112: #{tpu_custom_call.1} parent=107 // pred_fallthru
          _
        // Predicated region
        $region113: #{tpu_custom_call.1} parent=107 // pred_check
          %p899 = pneg %p292
        $region114: #{tpu_custom_call.1} parent=107 // pred_check_branch
          %901 = sbr.rel (%p899) target = $region116
        $region115: #{tpu_custom_call.1} parent=107 // pred_region
          %s902 = sand.u32 %s39, 1
          %s903 = scalar_lea.sflag [#allocation19], %s902
          %s904 = sand.u32 %s277, 1
          %s905 = smul.addr %s904, 8
          %s906 = scalar_lea.vmem [#allocation18], %s905
          %907 = dma.done %s903, 128
        $region116: #{tpu_custom_call.1} parent=107 // pred_fallthru
          _
        // Predicated region
        $region117: #{tpu_custom_call.1} parent=107 // pred_check
          %p908 = pneg %p318
        $region118: #{tpu_custom_call.1} parent=107 // pred_check_branch
          %910 = sbr.rel (%p908) target = $region120
        $region119: #{tpu_custom_call.1} parent=107 // pred_region
          %s911 = sand.u32 %s39, 1
          %s912 = scalar_lea.sflag [#allocation19], %s911
          %s913 = sand.u32 %s303, 1
          %s914 = smul.addr %s913, 8
          %s915 = scalar_lea.vmem [#allocation20], %s914
          %916 = dma.done %s912, 128
        $region120: #{tpu_custom_call.1} parent=107 // pred_fallthru
          _
      $region108: #{tpu_custom_call.1} parent=5 // pred_fallthru
        _
    $region6: #{tpu_custom_call.1} parent=1 // loop_footer
      %s37 = sadd.s32 1, %s33
    $region7: #{tpu_custom_call.1} parent=1 // loop_footer_branch
      %32 = sbr.rel target = $region3
    $region8: #{tpu_custom_call.1} parent=1 // loop_exit
      _
    %917 = vsyncpa [#allocation3], 1
    %s918 = scalar_lea.sflag [#allocation3], 1
    %919 = vsyncpa %s918, 1
    %920 = vsyncpa [#allocation6], 1
    %s921 = scalar_lea.sflag [#allocation6], 1
    %922 = vsyncpa %s921, 1
    %923 = vsyncpa [#allocation9], 1
    %924 = vsyncpa [#allocation12], 1
    %925 = vsyncpa [#allocation15], 1
    %926 = vsyncpa [#allocation4], 1
    %s927 = scalar_lea.sflag [#allocation4], 1
    %928 = vsyncpa %s927, 1
    %929 = vsyncpa [#allocation19], 1
    %s930 = scalar_lea.sflag [#allocation19], 1
    %931 = vsyncpa %s930, 1

</llo_original>
